<compile_context>
chip_gen: v5e
topology: v5e:2x2
jax: 0.10.0
libtpu: 0.0.40
codegen_flags: <defaults>
</compile_context>

<pallas_src>
import math
import numpy as np
import jax
import jax.numpy as jnp
from jax import lax
from jax.experimental import pallas as pl
from jax.experimental.pallas import tpu as pltpu

# ----------------------------- configuration ---------------------------------
BATCH = 2
CHANNELS_IN = 4
NCLASSES = 4
RESIZE = 16                 # H
WIMG = 2 * RESIZE           # W  (= 32)
HW = RESIZE * WIMG          # flattened spatial (= 512, multiple of 128)
ORDER = 2                   # polynomial order for the weighted LS fit
REG_LS = 0.01
MASK_PCT = 0.3
ZERO_ROWS = math.ceil(RESIZE * MASK_PCT)   # rows zeroed by index_fill
NROWS = BATCH * NCLASSES                   # packed (batch, class) rows = 8
NMOM = 8                                   # moment basis size (see build_wls_basis)
BETA_LANES = 128                           # lane-dense beta output width (one vreg)


# ------------------- cv2.getPerspectiveTransform replacement -----------------
def get_perspective_transform(src, dst):
    A, b = [], []
    for (x, y), (u, v) in zip(src, dst):
        A.append([x, y, 1, 0, 0, 0, -x * u, -y * u]); b.append(u)
        A.append([0, 0, 0, x, y, 1, -x * v, -y * v]); b.append(v)
    sol = np.linalg.solve(np.asarray(A, np.float64), np.asarray(b, np.float64))
    return np.append(sol, 1.0).reshape(3, 3).astype(np.float32)


def init_projective_transform():
    y_start, y_stop = 0.3, 1.0
    xd1, xd2, xd3, xd4 = 0.45, 0.55, 0.45, 0.55
    src = np.float32([[0.45, y_start], [0.55, y_start], [0.1, y_stop], [0.9, y_stop]])
    dst = np.float32([[xd3, y_start], [xd4, y_start], [xd1, y_stop], [xd2, y_stop]])
    M = np.broadcast_to(get_perspective_transform(src, dst)[None], (BATCH, 3, 3)).copy()
    M_inv = np.broadcast_to(get_perspective_transform(dst, src)[None], (BATCH, 3, 3)).copy()
    return M, M_inv


# ------------- ProjectiveGridGenerator (constant-folded on host) --------------
def projective_grid_generator(theta):
    """Exact forward of the reference module, constant-folded (theta is a compile-time
    constant here, so this runs once on host in numpy)."""
    lin_w = np.linspace(0.0, 1.0 - 1.0 / WIMG, WIMG, dtype=np.float32)
    lin_h = np.linspace(0.0, 1.0 - 1.0 / RESIZE, RESIZE, dtype=np.float32)
    base = np.empty((RESIZE, WIMG, 3), np.float32)
    base[:, :, 0] = lin_w[None, :]
    base[:, :, 1] = lin_h[:, None]
    base[:, :, 2] = 1.0
    base = base.reshape(HW, 3)
    # torch.bmm(base_grid.view(N, HW, 3), theta.transpose(1, 2))
    grid = np.einsum('pk,njk->npj', base, theta.astype(np.float32))
    # No epsilon on the homogeneous divide (matches torch.div in the reference);
    # the fixed homography here keeps the denominator well away from zero.
    return grid[:, :, :2] / grid[:, :, 2:3]          # (N, HW, 2)


def build_wls_basis_cat(theta):
    """Order-2 weighted-LS moment basis, canonical MXU layout.

    Moment order: [y^4, y^3, y^2, y, 1, x*y^2, x*y, x].
    Returns Qcat of shape (HW, BATCH*NMOM): column block n holds batch n's basis
    transposed, so one (rows,HW)@(HW,BATCH*NMOM) matmul yields all Gram moments with
    no implicit RHS transpose."""
    grid = projective_grid_generator(theta)
    x_map = grid[:, :, 0]
    y_map = 1.0 - grid[:, :, 1]
    ones = np.ones_like(y_map)
    Q = np.stack([y_map ** 4, y_map ** 3, y_map ** 2, y_map, ones,
                  x_map * y_map ** 2, x_map * y_map, x_map], axis=1)   # (N, NMOM, HW)
    Qcat = np.concatenate([Q[n].T for n in range(BATCH)], axis=1)      # (HW, N*NMOM)
    return Qcat.astype(np.float32)


def build_row_mask():
    """index_fill over H rows < ZERO_ROWS, expressed on the flat spatial axis: h<k <=> p<k*W."""
    return (np.arange(HW, dtype=np.int32) >= ZERO_ROWS * WIMG).astype(np.float32).reshape(1, HW)


# ------------------------------ fused Pallas kernel ----------------------------
def _fused_kernel(x_ref, wbd_ref, bbd_ref, qcat_ref, mask_ref,
                  out_ref, masked_ref, beta_ref):
    # ---- backbone 1x1 conv (+bias): one (8,8)@(8,512) MXU pass for both batches.
    # Block-diagonal weight / stacked bias are built in the wrapper (not in-kernel).
    x = x_ref[...]                                                       # (8, HW)
    out = jnp.dot(wbd_ref[...], x, preferred_element_type=jnp.float32) + bbd_ref[...]
    out_ref[...] = out

    # ---- 'square' activation + index_fill row mask (single vmul with constant mask) ----
    masked = (out * out) * mask_ref[...]                                 # (8, HW)
    masked_ref[...] = masked

    # ---- weighted-LS moments: Z = (W*Y0)^T (W*Y0), X = (W*Y0)^T (W*x)  ->  w^2 in the
    # Gram.  Both batches in ONE MXU call against the canonical (HW, 2*NMOM) basis.
    w2 = masked * masked                                                 # (8, HW)
    gram = jnp.dot(w2, qcat_ref[...], preferred_element_type=jnp.float32)  # (8, 2*NMOM)

    # Each packed (batch, class) row selects its own batch's moment block:
    # rows 0..3 (batch 0) -> cols 0..7, rows 4..7 (batch 1) -> cols 8..15.
    row = lax.broadcasted_iota(jnp.int32, (NROWS, NMOM), 0)
    mom = jnp.where(row < NCLASSES, gram[:, :NMOM], gram[:, NMOM:2 * NMOM])  # (8, NMOM)
    # columns: [Syy4, Sy3, Sy2, Sy1, S0, T2, T1, T0]

    # ---- closed-form regularized 3x3 solve (adjugate), vectorized over all 8 systems ----
    # (review: lane extracts below are low priority -- keep until a bundle dump says otherwise)
    reg = jnp.float32(REG_LS)
    a = mom[:, 0:1] + reg          # Z00
    bz = mom[:, 1:2]               # Z01 = Z10
    cz = mom[:, 2:3]               # Z02 = Z20
    e = mom[:, 2:3] + reg          # Z11
    f = mom[:, 3:4]                # Z12 = Z21
    i = mom[:, 4:5] + reg          # Z22
    t2 = mom[:, 5:6]
    t1 = mom[:, 6:7]
    t0 = mom[:, 7:8]
    c00 = e * i - f * f
    c01 = cz * f - bz * i
    c02 = bz * f - cz * e
    c11 = a * i - cz * cz
    c12 = bz * cz - a * f
    c22 = a * e - bz * bz
    det = a * c00 + bz * c01 + cz * c02
    inv_det = 1.0 / det            # exact divide; pl.reciprocal(approx=True) is optional
    beta_y2 = (c00 * t2 + c01 * t1 + c02 * t0) * inv_det
    beta_y1 = (c01 * t2 + c11 * t1 + c12 * t0) * inv_det
    beta_c = (c02 * t2 + c12 * t1 + c22 * t0) * inv_det

    # ---- lane-dense beta store: one unmasked (8,128) vst; coefficients in lanes 0..2 ----
    lane = lax.broadcasted_iota(jnp.int32, (NROWS, BETA_LANES), 1)
    beta_ref[...] = jnp.where(lane == 0, beta_y2,
                      jnp.where(lane == 1, beta_y1,
                        jnp.where(lane == 2, beta_c, jnp.float32(0.0))))


def fused_forward(x2d, w_bd, b_bd, Qcat, mask):
    return pl.pallas_call(
        _fused_kernel,
        out_shape=(jax.ShapeDtypeStruct((NROWS, HW), jnp.float32),          # conv output (logits)
                   jax.ShapeDtypeStruct((NROWS, HW), jnp.float32),          # masked weight map
                   jax.ShapeDtypeStruct((NROWS, BETA_LANES), jnp.float32)), # betas (lane-padded)
        in_specs=[pl.BlockSpec(memory_space=pltpu.MemorySpace.VMEM)] * 5,
        out_specs=(pl.BlockSpec(memory_space=pltpu.MemorySpace.VMEM),) * 3,
    )(x2d, w_bd, b_bd, Qcat, mask)


# ------------------------------ Net.forward -----------------------------------
@jax.jit
def net_forward(x, conv_w, conv_b, Qcat, mask, M):
    N, Cin, H, Wimg = x.shape
    x2d = x.reshape(N * Cin, H * Wimg)               # metadata-only reshape (batch-major rows)

    # Hoisted out of the kernel (review): block-diagonal weight / stacked bias.
    w_bd = jnp.kron(jnp.eye(BATCH, dtype=conv_w.dtype), conv_w)   # (8, 8)
    b_bd = jnp.tile(conv_b, (BATCH, 1))                           # (8, 1)

    out2d, masked2d, betas_pad = fused_forward(x2d, w_bd, b_bd, Qcat, mask)

    output = out2d.reshape(N, NCLASSES, H, Wimg)
    masked = masked2d.reshape(N, NCLASSES, H, Wimg)
    betas = betas_pad[:, :3].reshape(N, NCLASSES, 3, 1)   # [y^2 coeff, y coeff, const]

    beta0 = betas[:, 0]
    beta1 = betas[:, 1]
    beta2 = betas[:, 2] if NCLASSES > 2 else None
    beta3 = betas[:, 3] if NCLASSES > 3 else None
    line, horizon = None, None                       # classification branch disabled
    return beta0, beta1, beta2, beta3, masked, M, output, line, horizon


# ---------------------------------- main ---------------------------------------
if __name__ == "__main__":
    key = jax.random.PRNGKey(0)
    k1, k2, k3 = jax.random.split(key, 3)
    x = jax.random.normal(k1, (BATCH, CHANNELS_IN, RESIZE, WIMG), jnp.float32)
    conv_w = 0.1 * jax.random.normal(k2, (NCLASSES, CHANNELS_IN), jnp.float32)
    conv_b = 0.01 * jax.random.normal(k3, (NCLASSES, 1), jnp.float32)

    M_np, M_inv_np = init_projective_transform()
    Qcat = jnp.asarray(build_wls_basis_cat(M_np))    # (HW, BATCH*NMOM) constant moment basis
    mask = jnp.asarray(build_row_mask())             # (1, HW) constant 0/1 row mask
    M = jnp.asarray(M_np)

    outs = net_forward(x, conv_w, conv_b, Qcat, mask, M)
    for o in outs:
        if o is not None:
            jax.block_until_ready(o)
    print("KERNEL_OK")
</pallas_src>

<mosaic_0001>
module attributes {stable_mosaic.version = 11 : i64} {
  func.func @_fused_kernel(%arg0: memref<8x512xf32, #tpu.memory_space<vmem>>, %arg1: memref<8x8xf32, #tpu.memory_space<vmem>>, %arg2: memref<8x1xf32, #tpu.memory_space<vmem>>, %arg3: memref<512x16xf32, #tpu.memory_space<vmem>>, %arg4: memref<1x512xf32, #tpu.memory_space<vmem>>, %arg5: memref<8x512xf32, #tpu.memory_space<vmem>>, %arg6: memref<8x512xf32, #tpu.memory_space<vmem>>, %arg7: memref<8x128xf32, #tpu.memory_space<vmem>>) attributes {dimension_semantics = [], scalar_prefetch = 0 : i64, scratch_operands = 0 : i64, tpu.core_type = #tpu.core_type<tc>} {
    %c0 = arith.constant 0 : index
    %c0_0 = arith.constant 0 : index
    %0 = vector.load %arg0[%c0, %c0_0] : memref<8x512xf32, #tpu.memory_space<vmem>>, vector<8x512xf32>
    %c0_1 = arith.constant 0 : index
    %c0_2 = arith.constant 0 : index
    %1 = vector.load %arg1[%c0_1, %c0_2] : memref<8x8xf32, #tpu.memory_space<vmem>>, vector<8x8xf32>
    %cst = arith.constant dense<0.000000e+00> : vector<8x512xf32>
    %2 = tpu.matmul %1, %0, %cst {dimension_numbers = #tpu.dot_dimension_numbers<[1], [0], [0], [1], [0, 0, 1, 1], [], []>} : vector<8x8xf32>, vector<8x512xf32>, vector<8x512xf32> -> vector<8x512xf32>
    %c0_3 = arith.constant 0 : index
    %c0_4 = arith.constant 0 : index
    %3 = vector.load %arg2[%c0_3, %c0_4] : memref<8x1xf32, #tpu.memory_space<vmem>>, vector<8x1xf32>
    %4 = vector.broadcast %3 : vector<8x1xf32> to vector<8x512xf32>
    %5 = arith.addf %2, %4 : vector<8x512xf32>
    %c0_5 = arith.constant 0 : index
    %c0_6 = arith.constant 0 : index
    %6 = vector.load %arg5[%c0_5, %c0_6] : memref<8x512xf32, #tpu.memory_space<vmem>>, vector<8x512xf32>
    tpu.vector_store %arg5[%c0_5, %c0_6], %5 {strides = array<i32>} : memref<8x512xf32, #tpu.memory_space<vmem>>, vector<8x512xf32>,
    %7 = arith.mulf %5, %5 : vector<8x512xf32>
    %c0_7 = arith.constant 0 : index
    %c0_8 = arith.constant 0 : index
    %8 = vector.load %arg4[%c0_7, %c0_8] : memref<1x512xf32, #tpu.memory_space<vmem>>, vector<1x512xf32>
    %9 = vector.broadcast %8 : vector<1x512xf32> to vector<8x512xf32>
    %10 = arith.mulf %7, %9 : vector<8x512xf32>
    %c0_9 = arith.constant 0 : index
    %c0_10 = arith.constant 0 : index
    %11 = vector.load %arg6[%c0_9, %c0_10] : memref<8x512xf32, #tpu.memory_space<vmem>>, vector<8x512xf32>
    tpu.vector_store %arg6[%c0_9, %c0_10], %10 {strides = array<i32>} : memref<8x512xf32, #tpu.memory_space<vmem>>, vector<8x512xf32>,
    %12 = arith.mulf %10, %10 : vector<8x512xf32>
    %c0_11 = arith.constant 0 : index
    %c0_12 = arith.constant 0 : index
    %13 = vector.load %arg3[%c0_11, %c0_12] : memref<512x16xf32, #tpu.memory_space<vmem>>, vector<512x16xf32>
    %cst_13 = arith.constant dense<0.000000e+00> : vector<8x16xf32>
    %14 = tpu.matmul %12, %13, %cst_13 {dimension_numbers = #tpu.dot_dimension_numbers<[1], [0], [0], [1], [0, 0, 1, 1], [], []>} : vector<8x512xf32>, vector<512x16xf32>, vector<8x16xf32> -> vector<8x16xf32>
    %15 = tpu.iota {dimensions = array<i32: 0>} : vector<8x8xi32>
    %c4_i32 = arith.constant 4 : i32
    %16 = vector.broadcast %c4_i32 : i32 to vector<8x8xi32>
    %17 = arith.cmpi slt, %15, %16 : vector<8x8xi32>
    %18 = vector.extract_strided_slice %14 {offsets = [0, 0], sizes = [8, 8], strides = [1, 1]} : vector<8x16xf32> to vector<8x8xf32>
    %19 = vector.extract_strided_slice %14 {offsets = [0, 8], sizes = [8, 8], strides = [1, 1]} : vector<8x16xf32> to vector<8x8xf32>
    %20 = arith.select %17, %18, %19 : vector<8x8xi1>, vector<8x8xf32>
    %21 = vector.extract_strided_slice %20 {offsets = [0, 0], sizes = [8, 1], strides = [1, 1]} : vector<8x8xf32> to vector<8x1xf32>
    %cst_14 = arith.constant 0.00999999977 : f32
    %22 = vector.broadcast %cst_14 : f32 to vector<8x1xf32>
    %23 = arith.addf %21, %22 : vector<8x1xf32>
    %24 = vector.extract_strided_slice %20 {offsets = [0, 1], sizes = [8, 1], strides = [1, 1]} : vector<8x8xf32> to vector<8x1xf32>
    %25 = vector.extract_strided_slice %20 {offsets = [0, 2], sizes = [8, 1], strides = [1, 1]} : vector<8x8xf32> to vector<8x1xf32>
    %26 = vector.extract_strided_slice %20 {offsets = [0, 2], sizes = [8, 1], strides = [1, 1]} : vector<8x8xf32> to vector<8x1xf32>
    %cst_15 = arith.constant 0.00999999977 : f32
    %27 = vector.broadcast %cst_15 : f32 to vector<8x1xf32>
    %28 = arith.addf %26, %27 : vector<8x1xf32>
    %29 = vector.extract_strided_slice %20 {offsets = [0, 3], sizes = [8, 1], strides = [1, 1]} : vector<8x8xf32> to vector<8x1xf32>
    %30 = vector.extract_strided_slice %20 {offsets = [0, 4], sizes = [8, 1], strides = [1, 1]} : vector<8x8xf32> to vector<8x1xf32>
    %cst_16 = arith.constant 0.00999999977 : f32
    %31 = vector.broadcast %cst_16 : f32 to vector<8x1xf32>
    %32 = arith.addf %30, %31 : vector<8x1xf32>
    %33 = vector.extract_strided_slice %20 {offsets = [0, 5], sizes = [8, 1], strides = [1, 1]} : vector<8x8xf32> to vector<8x1xf32>
    %34 = vector.extract_strided_slice %20 {offsets = [0, 6], sizes = [8, 1], strides = [1, 1]} : vector<8x8xf32> to vector<8x1xf32>
    %35 = vector.extract_strided_slice %20 {offsets = [0, 7], sizes = [8, 1], strides = [1, 1]} : vector<8x8xf32> to vector<8x1xf32>
    %36 = arith.mulf %28, %32 : vector<8x1xf32>
    %37 = arith.mulf %29, %29 : vector<8x1xf32>
    %38 = arith.subf %36, %37 : vector<8x1xf32>
    %39 = arith.mulf %25, %29 : vector<8x1xf32>
    %40 = arith.mulf %24, %32 : vector<8x1xf32>
    %41 = arith.subf %39, %40 : vector<8x1xf32>
    %42 = arith.mulf %24, %29 : vector<8x1xf32>
    %43 = arith.mulf %25, %28 : vector<8x1xf32>
    %44 = arith.subf %42, %43 : vector<8x1xf32>
    %45 = arith.mulf %23, %32 : vector<8x1xf32>
    %46 = arith.mulf %25, %25 : vector<8x1xf32>
    %47 = arith.subf %45, %46 : vector<8x1xf32>
    %48 = arith.mulf %24, %25 : vector<8x1xf32>
    %49 = arith.mulf %23, %29 : vector<8x1xf32>
    %50 = arith.subf %48, %49 : vector<8x1xf32>
    %51 = arith.mulf %23, %28 : vector<8x1xf32>
    %52 = arith.mulf %24, %24 : vector<8x1xf32>
    %53 = arith.subf %51, %52 : vector<8x1xf32>
    %54 = arith.mulf %23, %38 : vector<8x1xf32>
    %55 = arith.mulf %24, %41 : vector<8x1xf32>
    %56 = arith.addf %54, %55 : vector<8x1xf32>
    %57 = arith.mulf %25, %44 : vector<8x1xf32>
    %58 = arith.addf %56, %57 : vector<8x1xf32>
    %cst_17 = arith.constant 1.000000e+00 : f32
    %59 = vector.broadcast %cst_17 : f32 to vector<8x1xf32>
    %60 = arith.divf %59, %58 : vector<8x1xf32>
    %61 = arith.mulf %38, %33 : vector<8x1xf32>
    %62 = arith.mulf %41, %34 : vector<8x1xf32>
    %63 = arith.addf %61, %62 : vector<8x1xf32>
    %64 = arith.mulf %44, %35 : vector<8x1xf32>
    %65 = arith.addf %63, %64 : vector<8x1xf32>
    %66 = arith.mulf %65, %60 : vector<8x1xf32>
    %67 = arith.mulf %41, %33 : vector<8x1xf32>
    %68 = arith.mulf %47, %34 : vector<8x1xf32>
    %69 = arith.addf %67, %68 : vector<8x1xf32>
    %70 = arith.mulf %50, %35 : vector<8x1xf32>
    %71 = arith.addf %69, %70 : vector<8x1xf32>
    %72 = arith.mulf %71, %60 : vector<8x1xf32>
    %73 = arith.mulf %44, %33 : vector<8x1xf32>
    %74 = arith.mulf %50, %34 : vector<8x1xf32>
    %75 = arith.addf %73, %74 : vector<8x1xf32>
    %76 = arith.mulf %53, %35 : vector<8x1xf32>
    %77 = arith.addf %75, %76 : vector<8x1xf32>
    %78 = arith.mulf %77, %60 : vector<8x1xf32>
    %79 = tpu.iota {dimensions = array<i32: 1>} : vector<8x128xi32>
    %c0_i32 = arith.constant 0 : i32
    %80 = vector.broadcast %c0_i32 : i32 to vector<8x128xi32>
    %81 = arith.cmpi eq, %79, %80 : vector<8x128xi32>
    %c1_i32 = arith.constant 1 : i32
    %82 = vector.broadcast %c1_i32 : i32 to vector<8x128xi32>
    %83 = arith.cmpi eq, %79, %82 : vector<8x128xi32>
    %c2_i32 = arith.constant 2 : i32
    %84 = vector.broadcast %c2_i32 : i32 to vector<8x128xi32>
    %85 = arith.cmpi eq, %79, %84 : vector<8x128xi32>
    %cst_18 = arith.constant 0.000000e+00 : f32
    %86 = vector.shape_cast %78 : vector<8x1xf32> to vector<8x1xf32>
    %87 = vector.broadcast %86 : vector<8x1xf32> to vector<8x128xf32>
    %88 = vector.broadcast %cst_18 : f32 to vector<8x128xf32>
    %89 = arith.select %85, %87, %88 : vector<8x128xi1>, vector<8x128xf32>
    %90 = vector.shape_cast %72 : vector<8x1xf32> to vector<8x1xf32>
    %91 = vector.broadcast %90 : vector<8x1xf32> to vector<8x128xf32>
    %92 = arith.select %83, %91, %89 : vector<8x128xi1>, vector<8x128xf32>
    %93 = vector.shape_cast %66 : vector<8x1xf32> to vector<8x1xf32>
    %94 = vector.broadcast %93 : vector<8x1xf32> to vector<8x128xf32>
    %95 = arith.select %81, %94, %92 : vector<8x128xi1>, vector<8x128xf32>
    %c0_19 = arith.constant 0 : index
    %c0_20 = arith.constant 0 : index
    %96 = vector.load %arg7[%c0_19, %c0_20] : memref<8x128xf32, #tpu.memory_space<vmem>>, vector<8x128xf32>
    tpu.vector_store %arg7[%c0_19, %c0_20], %95 {strides = array<i32>} : memref<8x128xf32, #tpu.memory_space<vmem>>, vector<8x128xf32>,
    return
  }
}

</mosaic_0001>

<llo_original>
// kernel: net_forward.1
$region0: #{net_forward.1}
  #allocation0 [shape = 'u32[]', space=smem, size = 0x4, offset = 0x4, fixed_abs, tag = 'smem constant byte address 0x4 - core index']
  #allocation1 [shape = 'u32[72,128]{1,0:T(1,128)}', space=vmem, size = 0x9000, scoped, tag = 'internal scratch']
  %s0 = inlined_call_operand.vmem [shape: f32[8,512], index: 0, kind: input, shape index: {}]
  %s1 = inlined_call_operand.vmem [shape: f32[8,8], index: 1, kind: input, shape index: {}]
  %s2 = inlined_call_operand.vmem [shape: f32[8,1], index: 2, kind: input, shape index: {}]
  %s3 = inlined_call_operand.vmem [shape: f32[512,16], index: 3, kind: input, shape index: {}]
  %s4 = inlined_call_operand.vmem [shape: f32[1,512], index: 4, kind: input, shape index: {}]
  %s5 = inlined_call_operand.vmem [shape: f32[8,512], index: 5, kind: output, shape index: {0}]
  %s6 = inlined_call_operand.vmem [shape: f32[8,512], index: 6, kind: output, shape index: {1}]
  %s7 = inlined_call_operand.vmem [shape: f32[8,128], index: 7, kind: output, shape index: {2}]
  %8 = xla_tuple %s5, %s6, %s7
  %s9 = sld [smem:[#allocation0]]
  $region46: #{net_forward.1} parent=0
    _
  %s11 = ssub.s32 1, %s9
  %s12 = scalar_select 0, %s11, %s9
  // Predicated region
  $region2: #{net_forward.1} parent=0 // pred_check
    _
  $region3: #{net_forward.1} parent=0 // pred_check_branch
    %14 = sbr.rel (0) target = $region5
  $region4: #{net_forward.1} parent=0 // pred_region
    _
  $region5: #{net_forward.1} parent=0 // pred_fallthru
    _
  // Predicated region
  $region6: #{net_forward.1} parent=0 // pred_check
    _
  $region7: #{net_forward.1} parent=0 // pred_check_branch
    %16 = sbr.rel (0) target = $region9
  $region8: #{net_forward.1} parent=0 // pred_region
    _
  $region9: #{net_forward.1} parent=0 // pred_fallthru
    _
  // Predicated region
  $region10: #{net_forward.1} parent=0 // pred_check
    _
  $region11: #{net_forward.1} parent=0 // pred_check_branch
    %18 = sbr.rel (0) target = $region13
  $region12: #{net_forward.1} parent=0 // pred_region
    _
  $region13: #{net_forward.1} parent=0 // pred_fallthru
    _
  // Predicated region
  $region14: #{net_forward.1} parent=0 // pred_check
    _
  $region15: #{net_forward.1} parent=0 // pred_check_branch
    %20 = sbr.rel (0) target = $region17
  $region16: #{net_forward.1} parent=0 // pred_region
    _
  $region17: #{net_forward.1} parent=0 // pred_fallthru
    _
  // Predicated region
  $region18: #{net_forward.1} parent=0 // pred_check
    _
  $region19: #{net_forward.1} parent=0 // pred_check_branch
    %22 = sbr.rel (0) target = $region21
  $region20: #{net_forward.1} parent=0 // pred_region
    _
  $region21: #{net_forward.1} parent=0 // pred_fallthru
    _
  %v23 = vld [vmem:[%s0] sm:$0xff]
  %v24 = vld [vmem:[%s0 + $0x8] sm:$0xff]
  %v25 = vld [vmem:[%s0 + $0x10] sm:$0xff]
  %v26 = vld [vmem:[%s0 + $0x18] sm:$0xff]
  %v27 = vld [vmem:[%s1] sm:$0xff]
  %v28 = vld [vmem:[%s2] sm:$0xff]
  %30 = vset.pattern.permute.xlu0 0
  %31 = vperm.xlu0 %30, %v28
  %v32 = vpop.permute.xlu0 %31
  %vm34 = vcmask 64512
  %v36 = vsel %vm34, %v27, 0
  %38 = vmatpush.msra.mxu0 0.0
  %39 = vmatpush.msra.mxu0 0.0
  %40 = vmatpush.msra.mxu0 0.0
  %41 = vmatpush.msra.mxu0 0.0
  %42 = vmatpush.msra.mxu0 0.0
  %43 = vmatpush.msra.mxu0 0.0
  %44 = vmatpush.msra.mxu0 0.0
  %45 = vmatpush.msra.mxu0 0.0
  %46 = vmatpush.msra.mxu0 0.0
  %47 = vmatpush.msra.mxu0 0.0
  %48 = vmatpush.msra.mxu0 0.0
  %49 = vmatpush.msra.mxu0 0.0
  %50 = vmatpush.msra.mxu0 0.0
  %51 = vmatpush.msra.mxu0 0.0
  %52 = vmatpush.msra.mxu0 0.0
  %53 = vmatpush.msra.mxu0 %v23
  %54 = vmatmul.f32.gmra.mxu0 %v36
  %v55 = vpop.f32.mrf.mxu0
  %v56 = vadd.f32 %v32, %v55
  %57 = vdwg.mxu0
  %58 = vmatpush.msra.mxu0 0.0
  %59 = vmatpush.msra.mxu0 0.0
  %60 = vmatpush.msra.mxu0 0.0
  %61 = vmatpush.msra.mxu0 0.0
  %62 = vmatpush.msra.mxu0 0.0
  %63 = vmatpush.msra.mxu0 0.0
  %64 = vmatpush.msra.mxu0 0.0
  %65 = vmatpush.msra.mxu0 0.0
  %66 = vmatpush.msra.mxu0 0.0
  %67 = vmatpush.msra.mxu0 0.0
  %68 = vmatpush.msra.mxu0 0.0
  %69 = vmatpush.msra.mxu0 0.0
  %70 = vmatpush.msra.mxu0 0.0
  %71 = vmatpush.msra.mxu0 0.0
  %72 = vmatpush.msra.mxu0 0.0
  %73 = vmatpush.msra.mxu0 %v24
  %74 = vmatmul.f32.gmra.mxu0 %v36
  %v75 = vpop.f32.mrf.mxu0
  %v76 = vadd.f32 %v32, %v75
  %77 = vdwg.mxu0
  %78 = vmatpush.msra.mxu0 0.0
  %79 = vmatpush.msra.mxu0 0.0
  %80 = vmatpush.msra.mxu0 0.0
  %81 = vmatpush.msra.mxu0 0.0
  %82 = vmatpush.msra.mxu0 0.0
  %83 = vmatpush.msra.mxu0 0.0
  %84 = vmatpush.msra.mxu0 0.0
  %85 = vmatpush.msra.mxu0 0.0
  %86 = vmatpush.msra.mxu0 0.0
  %87 = vmatpush.msra.mxu0 0.0
  %88 = vmatpush.msra.mxu0 0.0
  %89 = vmatpush.msra.mxu0 0.0
  %90 = vmatpush.msra.mxu0 0.0
  %91 = vmatpush.msra.mxu0 0.0
  %92 = vmatpush.msra.mxu0 0.0
  %93 = vmatpush.msra.mxu0 %v25
  %94 = vmatmul.f32.gmra.mxu0 %v36
  %v95 = vpop.f32.mrf.mxu0
  %v96 = vadd.f32 %v32, %v95
  %97 = vdwg.mxu0
  %98 = vmatpush.msra.mxu0 0.0
  %99 = vmatpush.msra.mxu0 0.0
  %100 = vmatpush.msra.mxu0 0.0
  %101 = vmatpush.msra.mxu0 0.0
  %102 = vmatpush.msra.mxu0 0.0
  %103 = vmatpush.msra.mxu0 0.0
  %104 = vmatpush.msra.mxu0 0.0
  %105 = vmatpush.msra.mxu0 0.0
  %106 = vmatpush.msra.mxu0 0.0
  %107 = vmatpush.msra.mxu0 0.0
  %108 = vmatpush.msra.mxu0 0.0
  %109 = vmatpush.msra.mxu0 0.0
  %110 = vmatpush.msra.mxu0 0.0
  %111 = vmatpush.msra.mxu0 0.0
  %112 = vmatpush.msra.mxu0 0.0
  %113 = vmatpush.msra.mxu0 %v26
  %114 = vmatmul.f32.gmra.mxu0 %v36
  %v115 = vpop.f32.mrf.mxu0
  %v116 = vadd.f32 %v32, %v115
  %117 = vdwg.mxu0
  %118 = vst [vmem:[%s5] sm:$0xff] %v56
  %119 = vst [vmem:[%s5 + $0x8] sm:$0xff] %v76
  %120 = vst [vmem:[%s5 + $0x10] sm:$0xff] %v96
  %121 = vst [vmem:[%s5 + $0x18] sm:$0xff] %v116
  %v122 = vmul.f32 %v56, %v56
  %v123 = vmul.f32 %v76, %v76
  %v124 = vmul.f32 %v96, %v96
  %v125 = vmul.f32 %v116, %v116
  %v126 = vld [vmem:[%s4] sm:$0xf]
  %v128 = vperm.slane %v126, 0
  %v129 = vperm.slane %v126, 1
  %v130 = vperm.slane %v126, 2
  %v131 = vperm.slane %v126, 3
  %v136 = vmul.f32 %v122, %v128
  %v137 = vmul.f32 %v123, %v129
  %v138 = vmul.f32 %v124, %v130
  %v139 = vmul.f32 %v125, %v131
  %140 = vst [vmem:[%s6] sm:$0xff] %v136
  %141 = vst [vmem:[%s6 + $0x8] sm:$0xff] %v137
  %142 = vst [vmem:[%s6 + $0x10] sm:$0xff] %v138
  %143 = vst [vmem:[%s6 + $0x18] sm:$0xff] %v139
  %v144 = vmul.f32 %v136, %v136
  %v145 = vmul.f32 %v137, %v137
  %v146 = vmul.f32 %v138, %v138
  %v147 = vmul.f32 %v139, %v139
  %v148 = vld [vmem:[%s3] sm:$0xff]
  %v149 = vld [vmem:[%s3 + $0x8] sm:$0xff]
  %v150 = vld [vmem:[%s3 + $0x10] sm:$0xff]
  %v151 = vld [vmem:[%s3 + $0x18] sm:$0xff]
  %v152 = vld [vmem:[%s3 + $0x20] sm:$0xff]
  %v153 = vld [vmem:[%s3 + $0x28] sm:$0xff]
  %v154 = vld [vmem:[%s3 + $0x30] sm:$0xff]
  %v155 = vld [vmem:[%s3 + $0x38] sm:$0xff]
  %v156 = vld [vmem:[%s3 + $0x40] sm:$0xff]
  %v157 = vld [vmem:[%s3 + $0x48] sm:$0xff]
  %v158 = vld [vmem:[%s3 + $0x50] sm:$0xff]
  %v159 = vld [vmem:[%s3 + $0x58] sm:$0xff]
  %v160 = vld [vmem:[%s3 + $0x60] sm:$0xff]
  %v161 = vld [vmem:[%s3 + $0x68] sm:$0xff]
  %v162 = vld [vmem:[%s3 + $0x70] sm:$0xff]
  %v163 = vld [vmem:[%s3 + $0x78] sm:$0xff]
  %v164 = vld [vmem:[%s3 + $0x80] sm:$0xff]
  %v165 = vld [vmem:[%s3 + $0x88] sm:$0xff]
  %v166 = vld [vmem:[%s3 + $0x90] sm:$0xff]
  %v167 = vld [vmem:[%s3 + $0x98] sm:$0xff]
  %v168 = vld [vmem:[%s3 + $0xa0] sm:$0xff]
  %v169 = vld [vmem:[%s3 + $0xa8] sm:$0xff]
  %v170 = vld [vmem:[%s3 + $0xb0] sm:$0xff]
  %v171 = vld [vmem:[%s3 + $0xb8] sm:$0xff]
  %v172 = vld [vmem:[%s3 + $0xc0] sm:$0xff]
  %v173 = vld [vmem:[%s3 + $0xc8] sm:$0xff]
  %v174 = vld [vmem:[%s3 + $0xd0] sm:$0xff]
  %v175 = vld [vmem:[%s3 + $0xd8] sm:$0xff]
  %v176 = vld [vmem:[%s3 + $0xe0] sm:$0xff]
  %v177 = vld [vmem:[%s3 + $0xe8] sm:$0xff]
  %v178 = vld [vmem:[%s3 + $0xf0] sm:$0xff]
  %v179 = vld [vmem:[%s3 + $0xf8] sm:$0xff]
  %v180 = vld [vmem:[%s3 + $0x100] sm:$0xff]
  %v181 = vld [vmem:[%s3 + $0x108] sm:$0xff]
  %v182 = vld [vmem:[%s3 + $0x110] sm:$0xff]
  %v183 = vld [vmem:[%s3 + $0x118] sm:$0xff]
  %v184 = vld [vmem:[%s3 + $0x120] sm:$0xff]
  %v185 = vld [vmem:[%s3 + $0x128] sm:$0xff]
  %v186 = vld [vmem:[%s3 + $0x130] sm:$0xff]
  %v187 = vld [vmem:[%s3 + $0x138] sm:$0xff]
  %v188 = vld [vmem:[%s3 + $0x140] sm:$0xff]
  %v189 = vld [vmem:[%s3 + $0x148] sm:$0xff]
  %v190 = vld [vmem:[%s3 + $0x150] sm:$0xff]
  %v191 = vld [vmem:[%s3 + $0x158] sm:$0xff]
  %v192 = vld [vmem:[%s3 + $0x160] sm:$0xff]
  %v193 = vld [vmem:[%s3 + $0x168] sm:$0xff]
  %v194 = vld [vmem:[%s3 + $0x170] sm:$0xff]
  %v195 = vld [vmem:[%s3 + $0x178] sm:$0xff]
  %v196 = vld [vmem:[%s3 + $0x180] sm:$0xff]
  %v197 = vld [vmem:[%s3 + $0x188] sm:$0xff]
  %v198 = vld [vmem:[%s3 + $0x190] sm:$0xff]
  %v199 = vld [vmem:[%s3 + $0x198] sm:$0xff]
  %v200 = vld [vmem:[%s3 + $0x1a0] sm:$0xff]
  %v201 = vld [vmem:[%s3 + $0x1a8] sm:$0xff]
  %v202 = vld [vmem:[%s3 + $0x1b0] sm:$0xff]
  %v203 = vld [vmem:[%s3 + $0x1b8] sm:$0xff]
  %v204 = vld [vmem:[%s3 + $0x1c0] sm:$0xff]
  %v205 = vld [vmem:[%s3 + $0x1c8] sm:$0xff]
  %v206 = vld [vmem:[%s3 + $0x1d0] sm:$0xff]
  %v207 = vld [vmem:[%s3 + $0x1d8] sm:$0xff]
  %v208 = vld [vmem:[%s3 + $0x1e0] sm:$0xff]
  %v209 = vld [vmem:[%s3 + $0x1e8] sm:$0xff]
  %v210 = vld [vmem:[%s3 + $0x1f0] sm:$0xff]
  %v211 = vld [vmem:[%s3 + $0x1f8] sm:$0xff]
  %212 = vmatpush.msra.mxu0 %v163
  %213 = vmatpush.msra.mxu0 %v162
  %214 = vmatpush.msra.mxu0 %v161
  %215 = vmatpush.msra.mxu0 %v160
  %216 = vmatpush.msra.mxu0 %v159
  %217 = vmatpush.msra.mxu0 %v158
  %218 = vmatpush.msra.mxu0 %v157
  %219 = vmatpush.msra.mxu0 %v156
  %220 = vmatpush.msra.mxu0 %v155
  %221 = vmatpush.msra.mxu0 %v154
  %222 = vmatpush.msra.mxu0 %v153
  %223 = vmatpush.msra.mxu0 %v152
  %224 = vmatpush.msra.mxu0 %v151
  %225 = vmatpush.msra.mxu0 %v150
  %226 = vmatpush.msra.mxu0 %v149
  %227 = vmatpush.msra.mxu0 %v148
  %228 = vmatmul.f32.gmra.mxu0 %v144
  %v229 = vpop.f32.mrf.mxu0
  %v230 = vadd.f32 0.0, %v229
  %231 = vdwg.mxu0
  %232 = vmatpush.msra.mxu0 %v179
  %233 = vmatpush.msra.mxu0 %v178
  %234 = vmatpush.msra.mxu0 %v177
  %235 = vmatpush.msra.mxu0 %v176
  %236 = vmatpush.msra.mxu0 %v175
  %237 = vmatpush.msra.mxu0 %v174
  %238 = vmatpush.msra.mxu0 %v173
  %239 = vmatpush.msra.mxu0 %v172
  %240 = vmatpush.msra.mxu0 %v171
  %241 = vmatpush.msra.mxu0 %v170
  %242 = vmatpush.msra.mxu0 %v169
  %243 = vmatpush.msra.mxu0 %v168
  %244 = vmatpush.msra.mxu0 %v167
  %245 = vmatpush.msra.mxu0 %v166
  %246 = vmatpush.msra.mxu0 %v165
  %247 = vmatpush.msra.mxu0 %v164
  %248 = vmatmul.f32.gmra.mxu0 %v145
  %v249 = vpop.f32.mrf.mxu0
  %v250 = vadd.f32 %v230, %v249
  %251 = vdwg.mxu0
  %252 = vmatpush.msra.mxu0 %v195
  %253 = vmatpush.msra.mxu0 %v194
  %254 = vmatpush.msra.mxu0 %v193
  %255 = vmatpush.msra.mxu0 %v192
  %256 = vmatpush.msra.mxu0 %v191
  %257 = vmatpush.msra.mxu0 %v190
  %258 = vmatpush.msra.mxu0 %v189
  %259 = vmatpush.msra.mxu0 %v188
  %260 = vmatpush.msra.mxu0 %v187
  %261 = vmatpush.msra.mxu0 %v186
  %262 = vmatpush.msra.mxu0 %v185
  %263 = vmatpush.msra.mxu0 %v184
  %264 = vmatpush.msra.mxu0 %v183
  %265 = vmatpush.msra.mxu0 %v182
  %266 = vmatpush.msra.mxu0 %v181
  %267 = vmatpush.msra.mxu0 %v180
  %268 = vmatmul.f32.gmra.mxu0 %v146
  %v269 = vpop.f32.mrf.mxu0
  %v270 = vadd.f32 %v250, %v269
  %271 = vdwg.mxu0
  %272 = vmatpush.msra.mxu0 %v211
  %273 = vmatpush.msra.mxu0 %v210
  %274 = vmatpush.msra.mxu0 %v209
  %275 = vmatpush.msra.mxu0 %v208
  %276 = vmatpush.msra.mxu0 %v207
  %277 = vmatpush.msra.mxu0 %v206
  %278 = vmatpush.msra.mxu0 %v205
  %279 = vmatpush.msra.mxu0 %v204
  %280 = vmatpush.msra.mxu0 %v203
  %281 = vmatpush.msra.mxu0 %v202
  %282 = vmatpush.msra.mxu0 %v201
  %283 = vmatpush.msra.mxu0 %v200
  %284 = vmatpush.msra.mxu0 %v199
  %285 = vmatpush.msra.mxu0 %v198
  %286 = vmatpush.msra.mxu0 %v197
  %287 = vmatpush.msra.mxu0 %v196
  %288 = vmatmul.f32.gmra.mxu0 %v147
  %v289 = vpop.f32.mrf.mxu0
  %v290 = vadd.f32 %v270, %v289
  %291 = vdwg.mxu0
  %v292 = vlaneseq
  %v293 = vshrl.u32 %v292, 7
  %vm294 = vcmp.lt.s32.totalorder %v293, 4
  %296 = vrot.lane.b32.xlu0 %v290, 120
  %v297 = vpop.permute.xlu0 %296
  %v299 = vsel %vm294, %v290, %v297
  %v300 = vadd.f32 %v299, 0.01
  %302 = vrot.lane.b32.xlu0 %v300, 126
  %v303 = vpop.permute.xlu0 %302
  %v305 = vmul.f32 %v300, %v303
  %v306 = vmul.f32 %v299, %v299
  %308 = vrot.lane.b32.xlu0 %v306, 127
  %v309 = vpop.permute.xlu0 %308
  %v311 = vsub.f32 %v305, %v309
  %313 = vrot.lane.b32.xlu0 %v299, 127
  %v314 = vpop.permute.xlu0 %313
  %v316 = vmul.f32 %v299, %v314
  %317 = vrot.lane.b32.xlu0 %v300, 125
  %v318 = vpop.permute.xlu0 %317
  %v320 = vmul.f32 %v299, %v318
  %322 = vrot.lane.b32.xlu0 %v320, 1
  %v323 = vpop.permute.xlu0 %322
  %v325 = vsub.f32 %v316, %v323
  %326 = vrot.lane.b32.xlu0 %v299, 126
  %v327 = vpop.permute.xlu0 %326
  %v329 = vmul.f32 %v299, %v327
  %v330 = vmul.f32 %v299, %v300
  %332 = vrot.lane.b32.xlu0 %v330, 127
  %v333 = vpop.permute.xlu0 %332
  %v335 = vsub.f32 %v329, %v333
  %336 = vrot.lane.b32.xlu0 %v300, 124
  %v337 = vpop.permute.xlu0 %336
  %v339 = vmul.f32 %v300, %v337
  %340 = vrot.lane.b32.xlu0 %v306, 126
  %v341 = vpop.permute.xlu0 %340
  %v343 = vsub.f32 %v339, %v341
  %344 = vrot.lane.b32.xlu0 %v299, 125
  %v345 = vpop.permute.xlu0 %344
  %v347 = vmul.f32 %v300, %v345
  %349 = vrot.lane.b32.xlu0 %v347, 1
  %v350 = vpop.permute.xlu0 %349
  %v352 = vsub.f32 %v316, %v350
  %354 = vrot.lane.b32.xlu0 %v311, 126
  %v355 = vpop.permute.xlu0 %354
  %v357 = vmul.f32 %v300, %v355
  %359 = vrot.lane.b32.xlu0 %v325, 127
  %v360 = vpop.permute.xlu0 %359
  %v362 = vmul.f32 %v299, %v360
  %364 = vrot.lane.b32.xlu0 %v362, 127
  %v365 = vpop.permute.xlu0 %364
  %v367 = vadd.f32 %v357, %v365
  %369 = vrot.lane.b32.xlu0 %v335, 1
  %v370 = vpop.permute.xlu0 %369
  %v372 = vmul.f32 %v299, %v370
  %374 = vrot.lane.b32.xlu0 %v372, 126
  %v375 = vpop.permute.xlu0 %374
  %v377 = vadd.f32 %v367, %v375
  %v378 = vrcp.pop %v377
  %v379 = vmul.f32 %v377, %v378
  %v380 = vsub.f32 1.0, %v379
  %v381 = vmul.f32 %v378, %v380
  %v382 = vadd.f32 %v378, %v381
  %vm383 = vweird.f32 %v377
  %vm384 = vweird.f32 %v378
  %vm385 = vmor %vm383, %vm384
  %v386 = vsel %vm385, %v378, %v382
  %v387 = vand.u32 2147483647, %v377
  %vm388 = vcmp.eq.f32.partialorder %v387, 8.507059e+37
  %v389 = vand.u32 %v377, 2147483648
  %v390 = vor.u32 1.1754944e-38, %v389
  %v391 = vsel %vm388, %v390, %v386
  %v392 = vmul.f32 1.0, %v391
  %v393 = vmul.f32 %v311, %v345
  %394 = vrot.lane.b32.xlu0 %v299, 124
  %v395 = vpop.permute.xlu0 %394
  %v397 = vmul.f32 %v325, %v395
  %v398 = vadd.f32 %v393, %v397
  %399 = vrot.lane.b32.xlu0 %v299, 122
  %v400 = vpop.permute.xlu0 %399
  %v402 = vmul.f32 %v335, %v400
  %404 = vrot.lane.b32.xlu0 %v402, 1
  %v405 = vpop.permute.xlu0 %404
  %v407 = vadd.f32 %v398, %v405
  %409 = vrot.lane.b32.xlu0 %v392, 2
  %v410 = vpop.permute.xlu0 %409
  %v412 = vmul.f32 %v407, %v410
  %v413 = vmul.f32 %v325, %v345
  %v414 = vmul.f32 %v343, %v400
  %416 = vrot.lane.b32.xlu0 %v414, 2
  %v417 = vpop.permute.xlu0 %416
  %v419 = vadd.f32 %v413, %v417
  %v420 = vmul.f32 %v352, %v400
  %422 = vrot.lane.b32.xlu0 %v420, 1
  %v423 = vpop.permute.xlu0 %422
  %v425 = vadd.f32 %v419, %v423
  %v426 = vmul.f32 %v425, %v410
  %v427 = vmul.f32 %v335, %v395
  %428 = vrot.lane.b32.xlu0 %v299, 123
  %v429 = vpop.permute.xlu0 %428
  %v431 = vmul.f32 %v352, %v429
  %v432 = vadd.f32 %v427, %v431
  %433 = vrot.lane.b32.xlu0 %v299, 121
  %v434 = vpop.permute.xlu0 %433
  %v436 = vmul.f32 %v311, %v434
  %438 = vrot.lane.b32.xlu0 %v436, 1
  %v439 = vpop.permute.xlu0 %438
  %v441 = vadd.f32 %v432, %v439
  %442 = vrot.lane.b32.xlu0 %v392, 1
  %v443 = vpop.permute.xlu0 %442
  %v445 = vmul.f32 %v441, %v443
  %v446 = vlaneseq
  %v447 = vand.u32 %v446, 127
  %vm448 = vcmp.eq.s32.totalorder %v447, 0
  %vm449 = vcmp.eq.s32.totalorder %v447, 1
  %vm450 = vcmp.eq.s32.totalorder %v447, 2
  %452 = vset.pattern.permute.xlu0 1
  %453 = vperm.xlu0 %452, %v445
  %v454 = vpop.permute.xlu0 %453
  %v456 = vsel %vm450, %v454, 0.0
  %458 = vset.pattern.permute.xlu0 2
  %459 = vperm.xlu0 %458, %v426
  %v460 = vpop.permute.xlu0 %459
  %v462 = vsel %vm449, %v460, %v456
  %464 = vset.pattern.permute.xlu0 2
  %465 = vperm.xlu0 %464, %v412
  %v466 = vpop.permute.xlu0 %465
  %v468 = vsel %vm448, %v466, %v462
  %469 = vst [vmem:[%s7] sm:$0xff] %v468
  // Predicated region
  $region22: #{net_forward.1} parent=0 // pred_check
    _
  $region23: #{net_forward.1} parent=0 // pred_check_branch
    %471 = sbr.rel (0) target = $region25
  $region24: #{net_forward.1} parent=0 // pred_region
    _
  $region25: #{net_forward.1} parent=0 // pred_fallthru
    _
  // Predicated region
  $region26: #{net_forward.1} parent=0 // pred_check
    _
  $region27: #{net_forward.1} parent=0 // pred_check_branch
    %473 = sbr.rel (0) target = $region29
  $region28: #{net_forward.1} parent=0 // pred_region
    _
  $region29: #{net_forward.1} parent=0 // pred_fallthru
    _
  // Predicated region
  $region30: #{net_forward.1} parent=0 // pred_check
    _
  $region31: #{net_forward.1} parent=0 // pred_check_branch
    %475 = sbr.rel (0) target = $region33
  $region32: #{net_forward.1} parent=0 // pred_region
    _
  $region33: #{net_forward.1} parent=0 // pred_fallthru
    _
  // Predicated region
  $region34: #{net_forward.1} parent=0 // pred_check
    _
  $region35: #{net_forward.1} parent=0 // pred_check_branch
    %477 = sbr.rel (0) target = $region37
  $region36: #{net_forward.1} parent=0 // pred_region
    _
  $region37: #{net_forward.1} parent=0 // pred_fallthru
    _
  // Predicated region
  $region38: #{net_forward.1} parent=0 // pred_check
    _
  $region39: #{net_forward.1} parent=0 // pred_check_branch
    %479 = sbr.rel (0) target = $region41
  $region40: #{net_forward.1} parent=0 // pred_region
    _
  $region41: #{net_forward.1} parent=0 // pred_fallthru
    _
  // Predicated region
  $region42: #{net_forward.1} parent=0 // pred_check
    _
  $region43: #{net_forward.1} parent=0 // pred_check_branch
    %481 = sbr.rel (0) target = $region45
  $region44: #{net_forward.1} parent=0 // pred_region
    _
  $region45: #{net_forward.1} parent=0 // pred_fallthru
    _

</llo_original>
